<compile_context>
chip_gen: v5e
topology: v5e:2x2
jax: 0.10.0
libtpu: 0.0.40
codegen_flags: <defaults>
</compile_context>

<pallas_src>
import functools
import math

import jax
import jax.numpy as jnp
from jax import lax
from jax.experimental import pallas as pl
from jax.experimental.pallas import tpu as pltpu

_VMEM_CAP = 64 * 1024 * 1024     # smallest physical VMEM across v5e/v6e/v7x (v7x: 64 MiB / TC)
_VMEM_FLOOR = 32 * 1024 * 1024


def _vmem_limit(estimate_bytes):
    return int(min(_VMEM_CAP, max(_VMEM_FLOOR, 2 * estimate_bytes)))


# ---------------- kernel 1: fused QKV projection (one (tq,H) x (H,3H) matmul) ----------------
def _qkv_proj_kernel(x_ref, w_ref, b_ref, q_ref, k_ref, v_ref):
    H = q_ref.shape[-1]
    y = jnp.dot(x_ref[...], w_ref[...], preferred_element_type=jnp.float32) + b_ref[...]
    q_ref[...] = y[:, :H].astype(q_ref.dtype)
    k_ref[...] = y[:, H:2 * H].astype(k_ref.dtype)
    v_ref[...] = y[:, 2 * H:].astype(v_ref.dtype)


# ------- kernel 2: full-sequence attention + fused output proj / residual / LayerNorm -------
def _attn_kernel(q_ref, k_ref, v_ref, x_ref, wo_ref, bo_ref, gamma_ref, beta_ref,
                 o_ref, ctx_sc, *, num_heads, ln_eps, exp_dtype):
    H = q_ref.shape[-1]
    hd = H // num_heads

    # Static loop over heads; K/V are resident for the full sequence (tk == S), so this is a
    # plain (non-online) softmax over the whole key axis per head.
    for h in range(num_heads):
        sl = slice(h * hd, (h + 1) * hd)
        qh = q_ref[:, sl]                                   # (tq, hd)
        kh = k_ref[:, sl]                                   # (S,  hd)
        vh = v_ref[:, sl]                                   # (S,  hd)
        # scores; 1/sqrt(hd) already folded into Wq/bq in the wrapper.
        s = lax.dot_general(qh, kh, (((1,), (1,)), ((), ())),
                            preferred_element_type=jnp.float32)         # (tq, S) f32
        m = jnp.max(s, axis=-1, keepdims=True)
        p = jnp.exp((s - m).astype(exp_dtype))              # bf16 exp on bf16 activations
        denom = jnp.sum(p.astype(jnp.float32), axis=-1, keepdims=True)
        # TODO(synk): attention_mask / head_mask / attention-prob dropout (train) not implemented.
        ctx = jnp.dot(p.astype(vh.dtype), vh, preferred_element_type=jnp.float32)  # (tq, hd)
        # TODO(synk): on v6e/v7x a transposed pv matmul (N=tq instead of N=hd) would fill MXU width.
        ctx_sc[:, sl] = ctx * pl.reciprocal(denom, approx=True)

    # One full-width output projection (K = H) against the resident Wo, then
    # BertSelfOutput: bias + dropout(identity) + residual + LayerNorm.
    y = jnp.dot(ctx_sc[...].astype(wo_ref.dtype), wo_ref[...],
                preferred_element_type=jnp.float32)
    y = y + bo_ref[...] + x_ref[...].astype(jnp.float32)
    mean = jnp.mean(y, axis=-1, keepdims=True)
    var = jnp.mean(jnp.square(y - mean), axis=-1, keepdims=True)
    y = (y - mean) * lax.rsqrt(var + ln_eps)
    o_ref[...] = (y * gamma_ref[...] + beta_ref[...]).astype(o_ref.dtype)


# ------------------------------------------ wrapper ------------------------------------------
def bert_attention(x, params, *, num_heads, ln_eps=1e-12, q_block=256):
    S, H = x.shape
    assert H % num_heads == 0
    hd = H // num_heads
    dtype = x.dtype
    itm = jnp.dtype(dtype).itemsize

    # q-tile: as large as possible (amortize grid-step overhead) but keep >= 2 tiles when we
    # can, so the single "parallel" axis spans both v7x TensorCores.
    tq = min(q_block, S)
    if S // tq < 2 and S % 16 == 0 and (S // 2) % 8 == 0:
        tq = S // 2
    assert S % tq == 0, "seq_len must be a multiple of the q tile size"
    nq = S // tq

    scale = 1.0 / math.sqrt(hd)
    # nn.Linear weights are (out, in); pre-transpose once and fold the attention scale into
    # Wq/bq at trace time.  Fuse Wq|Wk|Wv -> (H, 3H) so kernel 1 does a single matmul.
    w_qkv = jnp.concatenate(
        [(params["wq"] * scale).T, params["wk"].T, params["wv"].T], axis=1).astype(dtype)
    b_qkv = jnp.concatenate(
        [params["bq"].reshape(1, H) * scale, params["bk"].reshape(1, H),
         params["bv"].reshape(1, H)], axis=1).astype(jnp.float32)
    wo_t = params["wo"].T.astype(dtype)
    bo = params["bo"].reshape(1, H).astype(jnp.float32)
    gamma = params["gamma"].reshape(1, H).astype(jnp.float32)
    beta = params["beta"].reshape(1, H).astype(jnp.float32)

    row_spec = pl.BlockSpec((tq, H), lambda i: (i, 0))

    # ---- kernel 1: fused QKV projection ----
    qkv_est = (2 * tq * H * itm            # x tile (double-buffered)
               + 2 * H * 3 * H * itm       # W_qkv (resident, 2 buffers)
               + 2 * 3 * H * 4             # b_qkv
               + 2 * 3 * tq * H * itm      # q, k, v output tiles
               + 4 * tq * 3 * H)           # f32 intermediate headroom
    qkv_cost = pl.CostEstimate(
        flops=int(2 * S * H * 3 * H), transcendentals=0,
        bytes_accessed=int(4 * S * H * itm + 3 * H * H * itm + 3 * H * 4))
    q, k, v = pl.pallas_call(
        _qkv_proj_kernel,
        grid=(nq,),
        in_specs=[row_spec,
                  pl.BlockSpec((H, 3 * H), lambda i: (0, 0)),
                  pl.BlockSpec((1, 3 * H), lambda i: (0, 0))],
        out_specs=[row_spec, row_spec, row_spec],
        out_shape=[jax.ShapeDtypeStruct((S, H), dtype)] * 3,
        compiler_params=pltpu.CompilerParams(
            dimension_semantics=("parallel",),
            vmem_limit_bytes=_vmem_limit(qkv_est)),
        cost_estimate=qkv_cost,
    )(x, w_qkv, b_qkv)

    # ---- kernel 2: attention (full-S K/V resident) + output proj + residual + LayerNorm ----
    exp_dtype = jnp.bfloat16 if dtype == jnp.bfloat16 else jnp.float32
    # NOTE: constant-index blocks (K, V, Wo) still allocate 2 buffers each; for H >= 2048 on
    # v7x, pipeline_mode=pl.Buffered(1) on these specs would halve that VMEM cost.
    kv_spec = pl.BlockSpec((S, H), lambda i: (0, 0))
    wo_spec = pl.BlockSpec((H, H), lambda i: (0, 0))
    vrow_spec = pl.BlockSpec((1, H), lambda i: (0, 0))
    attn_est = (2 * 3 * tq * H * itm       # q, x, out tiles (double-buffered)
                + 2 * 2 * S * H * itm      # K, V resident
                + 2 * H * H * itm          # Wo resident
                + 6 * H * 4                # bias / gamma / beta rows
                + 4 * tq * H               # ctx scratch (f32)
                + 8 * tq * S)              # (tq, S) score/prob spill headroom
    attn_cost = pl.CostEstimate(
        flops=int(4 * S * S * H + 2 * S * H * H),
        transcendentals=int(num_heads * S * S),
        bytes_accessed=int(5 * S * H * itm + H * H * itm + 3 * H * 4))
    out = pl.pallas_call(
        functools.partial(_attn_kernel, num_heads=num_heads, ln_eps=ln_eps,
                          exp_dtype=exp_dtype),
        grid=(nq,),
        in_specs=[row_spec, kv_spec, kv_spec, row_spec, wo_spec,
                  vrow_spec, vrow_spec, vrow_spec],
        out_specs=row_spec,
        out_shape=jax.ShapeDtypeStruct((S, H), dtype),
        scratch_shapes=[pltpu.VMEM((tq, H), jnp.float32)],   # per-q-tile context (all heads)
        compiler_params=pltpu.CompilerParams(
            dimension_semantics=("parallel",),
            vmem_limit_bytes=_vmem_limit(attn_est)),
        cost_estimate=attn_cost,
    )(q, k, v, x, wo_t, bo, gamma, beta)
    return out


# ------------------------------------------ test utils ------------------------------------------
def init_params(key, hidden_size):
    ks = jax.random.split(key, 4)
    std = 0.02
    return {
        "wq": std * jax.random.normal(ks[0], (hidden_size, hidden_size), jnp.float32),
        "wk": std * jax.random.normal(ks[1], (hidden_size, hidden_size), jnp.float32),
        "wv": std * jax.random.normal(ks[2], (hidden_size, hidden_size), jnp.float32),
        "wo": std * jax.random.normal(ks[3], (hidden_size, hidden_size), jnp.float32),
        "bq": jnp.full((1, hidden_size), 0.01, jnp.float32),
        "bk": jnp.full((1, hidden_size), -0.01, jnp.float32),
        "bv": jnp.full((1, hidden_size), 0.02, jnp.float32),
        "bo": jnp.full((1, hidden_size), 0.0, jnp.float32),
        "gamma": jnp.ones((1, hidden_size), jnp.float32),
        "beta": jnp.zeros((1, hidden_size), jnp.float32),
    }


def reference_forward(x, p, num_heads, ln_eps=1e-12):
    """Pure-JAX reference matching the PyTorch semantics (eval mode, no mask)."""
    S, H = x.shape
    hd = H // num_heads
    q = x @ p["wq"].T + p["bq"]
    k = x @ p["wk"].T + p["bk"]
    v = x @ p["wv"].T + p["bv"]
    qh = q.reshape(S, num_heads, hd).transpose(1, 0, 2)
    kh = k.reshape(S, num_heads, hd).transpose(1, 0, 2)
    vh = v.reshape(S, num_heads, hd).transpose(1, 0, 2)
    scores = jnp.einsum("hqd,hkd->hqk", qh, kh) / math.sqrt(hd)
    probs = jax.nn.softmax(scores, axis=-1)
    ctx = jnp.einsum("hqk,hkd->hqd", probs, vh)
    ctx = ctx.transpose(1, 0, 2).reshape(S, H)
    proj = ctx @ p["wo"].T + p["bo"]
    y = proj + x
    mean = jnp.mean(y, axis=-1, keepdims=True)
    var = jnp.mean((y - mean) ** 2, axis=-1, keepdims=True)
    y = (y - mean) / jnp.sqrt(var + ln_eps)
    return y * p["gamma"] + p["beta"]


if __name__ == "__main__":
    # Test 1: small single-tile config (S=8, H=32, 4 heads), f32.
    SEQ, HIDDEN, NUM_HEADS = 8, 32, 4
    kx, kp = jax.random.split(jax.random.PRNGKey(0))
    x = jax.random.normal(kx, (SEQ, HIDDEN), jnp.float32)
    params = init_params(kp, HIDDEN)
    out = jax.block_until_ready(bert_attention(x, params, num_heads=NUM_HEADS))
    ref = reference_forward(x, params, NUM_HEADS)
    assert out.shape == (SEQ, HIDDEN)
    assert jnp.allclose(out, ref, atol=2e-3, rtol=2e-3), "mismatch vs reference (test 1)"

    # Test 2: multi-tile grid (nq=2), hd=64 head lane-slices, H spanning two lane registers.
    S2, H2, NH2 = 256, 256, 4
    kx2, kp2 = jax.random.split(jax.random.PRNGKey(1))
    x2 = jax.random.normal(kx2, (S2, H2), jnp.float32)
    params2 = init_params(kp2, H2)
    out2 = jax.block_until_ready(
        bert_attention(x2, params2, num_heads=NH2, q_block=128))
    ref2 = reference_forward(x2, params2, NH2)
    assert jnp.allclose(out2, ref2, atol=2e-3, rtol=2e-3), "mismatch vs reference (test 2)"

    # Test 3: bf16 activations/weights (exercises the bf16-exp / bf16-matmul path).
    x3 = x2.astype(jnp.bfloat16)
    out3 = jax.block_until_ready(
        bert_attention(x3, params2, num_heads=NH2, q_block=128))
    assert jnp.allclose(out3.astype(jnp.float32), ref2, atol=0.1, rtol=0.05), \
        "mismatch vs reference (test 3, bf16)"

    print("KERNEL_OK")
</pallas_src>

<mosaic_0001>
module attributes {stable_mosaic.version = 11 : i64} {
  func.func @_qkv_proj_kernel(%arg0: i32, %arg1: memref<8x32xf32, #tpu.memory_space<vmem>>, %arg2: memref<32x96xf32, #tpu.memory_space<vmem>>, %arg3: memref<1x96xf32, #tpu.memory_space<vmem>>, %arg4: memref<8x32xf32, #tpu.memory_space<vmem>>, %arg5: memref<8x32xf32, #tpu.memory_space<vmem>>, %arg6: memref<8x32xf32, #tpu.memory_space<vmem>>) attributes {dimension_semantics = [#tpu.dimension_semantics<parallel>], iteration_bounds = array<i64: 1>, scalar_prefetch = 0 : i64, scratch_operands = 0 : i64, tpu.core_type = #tpu.core_type<tc>, window_params = [{transform_indices = @transform_0, window_bounds = array<i64: 8, 32>}, {pipeline_mode = #tpu.pipeline_mode<synchronous>, transform_indices = @transform_1, window_bounds = array<i64: 32, 96>}, {pipeline_mode = #tpu.pipeline_mode<synchronous>, transform_indices = @transform_2, window_bounds = array<i64: 1, 96>}, {transform_indices = @transform_3, window_bounds = array<i64: 8, 32>}, {transform_indices = @transform_4, window_bounds = array<i64: 8, 32>}, {transform_indices = @transform_5, window_bounds = array<i64: 8, 32>}]} {
    %c0 = arith.constant 0 : index
    %c0_0 = arith.constant 0 : index
    %0 = vector.load %arg1[%c0, %c0_0] : memref<8x32xf32, #tpu.memory_space<vmem>>, vector<8x32xf32>
    %c0_1 = arith.constant 0 : index
    %c0_2 = arith.constant 0 : index
    %1 = vector.load %arg2[%c0_1, %c0_2] : memref<32x96xf32, #tpu.memory_space<vmem>>, vector<32x96xf32>
    %cst = arith.constant dense<0.000000e+00> : vector<8x96xf32>
    %2 = tpu.matmul %0, %1, %cst {dimension_numbers = #tpu.dot_dimension_numbers<[1], [0], [0], [1], [0, 0, 1, 1], [], []>} : vector<8x32xf32>, vector<32x96xf32>, vector<8x96xf32> -> vector<8x96xf32>
    %c0_3 = arith.constant 0 : index
    %c0_4 = arith.constant 0 : index
    %3 = vector.load %arg3[%c0_3, %c0_4] : memref<1x96xf32, #tpu.memory_space<vmem>>, vector<1x96xf32>
    %4 = vector.broadcast %3 : vector<1x96xf32> to vector<8x96xf32>
    %5 = arith.addf %2, %4 : vector<8x96xf32>
    %6 = vector.extract_strided_slice %5 {offsets = [0, 0], sizes = [8, 32], strides = [1, 1]} : vector<8x96xf32> to vector<8x32xf32>
    %c0_5 = arith.constant 0 : index
    %c0_6 = arith.constant 0 : index
    %7 = vector.load %arg4[%c0_5, %c0_6] : memref<8x32xf32, #tpu.memory_space<vmem>>, vector<8x32xf32>
    tpu.vector_store %arg4[%c0_5, %c0_6], %6 {strides = array<i32>} : memref<8x32xf32, #tpu.memory_space<vmem>>, vector<8x32xf32>,
    %8 = vector.extract_strided_slice %5 {offsets = [0, 32], sizes = [8, 32], strides = [1, 1]} : vector<8x96xf32> to vector<8x32xf32>
    %c0_7 = arith.constant 0 : index
    %c0_8 = arith.constant 0 : index
    %9 = vector.load %arg5[%c0_7, %c0_8] : memref<8x32xf32, #tpu.memory_space<vmem>>, vector<8x32xf32>
    tpu.vector_store %arg5[%c0_7, %c0_8], %8 {strides = array<i32>} : memref<8x32xf32, #tpu.memory_space<vmem>>, vector<8x32xf32>,
    %10 = vector.extract_strided_slice %5 {offsets = [0, 64], sizes = [8, 32], strides = [1, 1]} : vector<8x96xf32> to vector<8x32xf32>
    %c0_9 = arith.constant 0 : index
    %c0_10 = arith.constant 0 : index
    %11 = vector.load %arg6[%c0_9, %c0_10] : memref<8x32xf32, #tpu.memory_space<vmem>>, vector<8x32xf32>
    tpu.vector_store %arg6[%c0_9, %c0_10], %10 {strides = array<i32>} : memref<8x32xf32, #tpu.memory_space<vmem>>, vector<8x32xf32>,
    return
  }
  func.func @transform_0(%arg0: i32) -> (i32, i32) {
    %c0_i32 = arith.constant 0 : i32
    %c0_i32_0 = arith.constant 0 : i32
    return %arg0, %c0_i32 : i32, i32
  }
  func.func @transform_1(%arg0: i32) -> (i32, i32) {
    %c0_i32 = arith.constant 0 : i32
    %c0_i32_0 = arith.constant 0 : i32
    %c0_i32_1 = arith.constant 0 : i32
    return %c0_i32, %c0_i32_0 : i32, i32
  }
  func.func @transform_2(%arg0: i32) -> (i32, i32) {
    %c0_i32 = arith.constant 0 : i32
    %c0_i32_0 = arith.constant 0 : i32
    %c0_i32_1 = arith.constant 0 : i32
    return %c0_i32, %c0_i32_0 : i32, i32
  }
  func.func @transform_3(%arg0: i32) -> (i32, i32) {
    %c0_i32 = arith.constant 0 : i32
    %c0_i32_0 = arith.constant 0 : i32
    return %arg0, %c0_i32 : i32, i32
  }
  func.func @transform_4(%arg0: i32) -> (i32, i32) {
    %c0_i32 = arith.constant 0 : i32
    %c0_i32_0 = arith.constant 0 : i32
    return %arg0, %c0_i32 : i32, i32
  }
  func.func @transform_5(%arg0: i32) -> (i32, i32) {
    %c0_i32 = arith.constant 0 : i32
    %c0_i32_0 = arith.constant 0 : i32
    return %arg0, %c0_i32 : i32, i32
  }
}

</mosaic_0001>

<llo_original>
// kernel: tpu_custom_call.1
$region0: #{tpu_custom_call.1}
  #allocation0 [shape = 'u32[]', space=smem, size = 0x4, offset = 0x4, fixed_abs, tag = 'smem constant byte address 0x4 - core index']
  #allocation1 [shape = 'u32[72,128]{1,0:T(1,128)}', space=vmem, size = 0x9000, scoped, tag = 'internal scratch']
  %s0 = inlined_call_operand.hbm [shape: f32[8,32], index: 0, kind: input, shape index: {}]
  %s1 = inlined_call_operand.hbm [shape: f32[32,96], index: 1, kind: input, shape index: {}]
  %s2 = inlined_call_operand.vmem [shape: f32[1,96], index: 2, kind: input, shape index: {}]
  %s3 = inlined_call_operand.hbm [shape: f32[8,32], index: 3, kind: output, shape index: {0}]
  %s4 = inlined_call_operand.hbm [shape: f32[8,32], index: 4, kind: output, shape index: {1}]
  %s5 = inlined_call_operand.hbm [shape: f32[8,32], index: 5, kind: output, shape index: {2}]
  %6 = xla_tuple %s3, %s4, %s5
  %s7 = sld [smem:[#allocation0]]
  $region46: #{tpu_custom_call.1} parent=0
    _
  %s9 = ssub.s32 1, %s7
  %s10 = scalar_select 0, %s9, %s7
  $region1: #{tpu_custom_call.1} parent=0
    #allocation2 [shape = 'u8[4096]{0}', space=vmem, size = 0x1000, scoped, tag = 'input window, operand 0, single buffered']
    #allocation3 [shape = 's32[1]{0}', space=sflag, size = 0x4, scoped, tag = 'scoped memory for tpu_custom_call.1']
    #allocation4 [shape = 's32[1]{0}', space=sflag, size = 0x4, scoped, tag = 'scoped memory for tpu_custom_call.1']
    #allocation5 [shape = 'u8[16384]{0}', space=vmem, size = 0x4000, scoped, tag = 'input window, operand 1, single buffered']
    #allocation6 [shape = 's32[1]{0}', space=sflag, size = 0x4, scoped, tag = 'scoped memory for tpu_custom_call.1']
    #allocation7 [shape = 'u8[4096]{0}', space=vmem, size = 0x1000, scoped, tag = 'output window, operand 0, single buffered']
    #allocation8 [shape = 'u8[4096]{0}', space=vmem, size = 0x1000, scoped, tag = 'output window, operand 1, single buffered']
    #allocation9 [shape = 's32[1]{0}', space=sflag, size = 0x4, scoped, tag = 'scoped memory for tpu_custom_call.1']
    #allocation10 [shape = 'u8[4096]{0}', space=vmem, size = 0x1000, scoped, tag = 'output window, operand 2, single buffered']
    %11 = vsyncpa [#allocation3], 0
    %12 = vsyncpa [#allocation6], 0
    %13 = vsyncpa [#allocation4], 0
    %14 = vsyncpa [#allocation9], 0
    // Predicated region
    $region2: #{tpu_custom_call.1} parent=1 // pred_check
      _
    $region3: #{tpu_custom_call.1} parent=1 // pred_check_branch
      %16 = sbr.rel (0) target = $region5
    $region4: #{tpu_custom_call.1} parent=1 // pred_region
      %18 = vsyncadd [#allocation3], 0
      %s20 = sshll.u32 %s0, 4
      %s21 = int_to_ptr.hbm [resolvable:$true] %s20
      %s22 = sshll.u32 [#allocation2], 4
      %s23 = int_to_ptr.vmem [resolvable:$true] %s22
      %25 = dma.hbm_to_vmem [thread:$0]  %s21, 128, %s23, [#allocation3]
    $region5: #{tpu_custom_call.1} parent=1 // pred_fallthru
      _
    // Predicated region
    $region6: #{tpu_custom_call.1} parent=1 // pred_check
      _
    $region7: #{tpu_custom_call.1} parent=1 // pred_check_branch
      %27 = sbr.rel (0) target = $region9
    $region8: #{tpu_custom_call.1} parent=1 // pred_region
      %29 = vsyncadd [#allocation6], 0
      %s30 = sshll.u32 %s1, 4
      %s31 = int_to_ptr.hbm [resolvable:$true] %s30
      %s32 = sshll.u32 [#allocation5], 4
      %s33 = int_to_ptr.vmem [resolvable:$true] %s32
      %38 = dma.hbm_to_vmem [thread:$0]  %s31, 512, %s33, [#allocation6], 128, 128, 8
    $region9: #{tpu_custom_call.1} parent=1 // pred_fallthru
      _
    // Predicated region
    $region10: #{tpu_custom_call.1} parent=1 // pred_check
      _
    $region11: #{tpu_custom_call.1} parent=1 // pred_check_branch
      %40 = sbr.rel (0) target = $region13
    $region12: #{tpu_custom_call.1} parent=1 // pred_region
      _
    $region13: #{tpu_custom_call.1} parent=1 // pred_fallthru
      _
    // Predicated region
    $region14: #{tpu_custom_call.1} parent=1 // pred_check
      _
    $region15: #{tpu_custom_call.1} parent=1 // pred_check_branch
      %42 = sbr.rel (0) target = $region17
    $region16: #{tpu_custom_call.1} parent=1 // pred_region
      %44 = dma.done [#allocation3], 128
    $region17: #{tpu_custom_call.1} parent=1 // pred_fallthru
      _
    // Predicated region
    $region18: #{tpu_custom_call.1} parent=1 // pred_check
      _
    $region19: #{tpu_custom_call.1} parent=1 // pred_check_branch
      %46 = sbr.rel (0) target = $region21
    $region20: #{tpu_custom_call.1} parent=1 // pred_region
      %48 = dma.done [#allocation6], 512
    $region21: #{tpu_custom_call.1} parent=1 // pred_fallthru
      _
    %v49 = vld [vmem:[#allocation2] sm:$0xff]
    %v50 = vld [vmem:[#allocation5] sm:$0xff]
    %v51 = vld [vmem:[#allocation5 + $0x8] sm:$0xff]
    %v52 = vld [vmem:[#allocation5 + $0x10] sm:$0xff]
    %v53 = vld [vmem:[#allocation5 + $0x18] sm:$0xff]
    %v54 = vld [vmem:[%s2] sm:$0x1]
    %v56 = vperm.slane %v54, 0
    %vm58 = vcmask 261120
    %v60 = vsel %vm58, %v49, 0
    %62 = vmatpush.msra.mxu0 0.0
    %63 = vmatpush.msra.mxu0 0.0
    %64 = vmatpush.msra.mxu0 0.0
    %65 = vmatpush.msra.mxu0 0.0
    %66 = vmatpush.msra.mxu0 0.0
    %67 = vmatpush.msra.mxu0 0.0
    %68 = vmatpush.msra.mxu0 0.0
    %69 = vmatpush.msra.mxu0 0.0
    %70 = vmatpush.msra.mxu0 0.0
    %71 = vmatpush.msra.mxu0 0.0
    %72 = vmatpush.msra.mxu0 0.0
    %73 = vmatpush.msra.mxu0 0.0
    %74 = vmatpush.msra.mxu0 %v53
    %75 = vmatpush.msra.mxu0 %v52
    %76 = vmatpush.msra.mxu0 %v51
    %77 = vmatpush.msra.mxu0 %v50
    %78 = vmatmul.f32.gmra.mxu0 %v60
    %v79 = vpop.f32.mrf.mxu0
    %v80 = vadd.f32 %v56, %v79
    %81 = vdwg.mxu0
    %82 = vst.msk [vmem:[#allocation7] sm:$0xff] %vm58, %v80
    %84 = vrot.lane.b32.xlu0 %v80, 96
    %v85 = vpop.permute.xlu0 %84
    %87 = vst.msk [vmem:[#allocation8] sm:$0xff] %vm58, %v85
    %88 = vrot.lane.b32.xlu0 %v80, 64
    %v89 = vpop.permute.xlu0 %88
    %91 = vst.msk [vmem:[#allocation10] sm:$0xff] %vm58, %v89
    // Predicated region
    $region22: #{tpu_custom_call.1} parent=1 // pred_check
      _
    $region23: #{tpu_custom_call.1} parent=1 // pred_check_branch
      %93 = sbr.rel (0) target = $region25
    $region24: #{tpu_custom_call.1} parent=1 // pred_region
      %95 = vsyncadd [#allocation4], 0
      %s97 = sshll.u32 [#allocation7], 4
      %s98 = int_to_ptr.vmem [resolvable:$true] %s97
      %s99 = sshll.u32 %s3, 4
      %s100 = int_to_ptr.hbm [resolvable:$true] %s99
      %102 = dma.vmem_to_hbm [thread:$0]  %s98, 128, %s100, [#allocation4]
    $region25: #{tpu_custom_call.1} parent=1 // pred_fallthru
      _
    // Predicated region
    $region26: #{tpu_custom_call.1} parent=1 // pred_check
      _
    $region27: #{tpu_custom_call.1} parent=1 // pred_check_branch
      %104 = sbr.rel (0) target = $region29
    $region28: #{tpu_custom_call.1} parent=1 // pred_region
      %106 = vsyncadd [#allocation9], 0
      %s108 = sshll.u32 [#allocation8], 4
      %s109 = int_to_ptr.vmem [resolvable:$true] %s108
      %s110 = sshll.u32 %s4, 4
      %s111 = int_to_ptr.hbm [resolvable:$true] %s110
      %113 = dma.vmem_to_hbm [thread:$0]  %s109, 128, %s111, [#allocation9]
    $region29: #{tpu_custom_call.1} parent=1 // pred_fallthru
      _
    // Predicated region
    $region30: #{tpu_custom_call.1} parent=1 // pred_check
      _
    $region31: #{tpu_custom_call.1} parent=1 // pred_check_branch
      %115 = sbr.rel (0) target = $region33
    $region32: #{tpu_custom_call.1} parent=1 // pred_region
      %117 = vsyncadd [#allocation9], 0
      %s119 = sshll.u32 [#allocation10], 4
      %s120 = int_to_ptr.vmem [resolvable:$true] %s119
      %s121 = sshll.u32 %s5, 4
      %s122 = int_to_ptr.hbm [resolvable:$true] %s121
      %124 = dma.vmem_to_hbm [thread:$0]  %s120, 128, %s122, [#allocation9]
    $region33: #{tpu_custom_call.1} parent=1 // pred_fallthru
      _
    // Predicated region
    $region34: #{tpu_custom_call.1} parent=1 // pred_check
      _
    $region35: #{tpu_custom_call.1} parent=1 // pred_check_branch
      %126 = sbr.rel (0) target = $region37
    $region36: #{tpu_custom_call.1} parent=1 // pred_region
      %128 = dma.done [#allocation4], 128
    $region37: #{tpu_custom_call.1} parent=1 // pred_fallthru
      _
    // Predicated region
    $region38: #{tpu_custom_call.1} parent=1 // pred_check
      _
    $region39: #{tpu_custom_call.1} parent=1 // pred_check_branch
      %130 = sbr.rel (0) target = $region41
    $region40: #{tpu_custom_call.1} parent=1 // pred_region
      %132 = dma.done [#allocation9], 128
    $region41: #{tpu_custom_call.1} parent=1 // pred_fallthru
      _
    // Predicated region
    $region42: #{tpu_custom_call.1} parent=1 // pred_check
      _
    $region43: #{tpu_custom_call.1} parent=1 // pred_check_branch
      %134 = sbr.rel (0) target = $region45
    $region44: #{tpu_custom_call.1} parent=1 // pred_region
      %136 = dma.done [#allocation9], 128
    $region45: #{tpu_custom_call.1} parent=1 // pred_fallthru
      _
    %137 = vsyncpa [#allocation3], 1
    %138 = vsyncpa [#allocation6], 1
    %139 = vsyncpa [#allocation4], 1
    %140 = vsyncpa [#allocation9], 1

</llo_original>
